<compile_context>
chip_gen: v7x
topology: tpu7x:2x2x1
jax: 0.10.0
libtpu: 0.0.40
codegen_flags: <defaults>
</compile_context>

<pallas_src>
import jax
import jax.numpy as jnp
from jax.experimental import pallas as pl
from jax.experimental.pallas import tpu as pltpu


def _round_up(x, m):
    return (x + m - 1) // m * m


def _pad_to(a, shape):
    return jnp.pad(a, [(0, t - s) for s, t in zip(a.shape, shape)])


def _discriminator_kernel(x_ref,
                          w1_ref, b1_ref,
                          w2_ref, b2_ref,
                          w3_ref, b3_ref,
                          w4_ref, b4_ref,
                          o_ref):
    """One batch tile of the 4-layer MLP + sigmoid.

    x_ref : (TILE_B, D)  bf16          (batch tile)
    w*    : bf16 weights, (in, out) layout; w4 is stored as a (1, H) row.
    b*    : f32 biases, (1, out); b4 is (1, 1).
    o_ref : (1, TILE_B)  f32           (lane-dense: batch on the lane axis)
    """
    f32, bf16 = jnp.float32, jnp.bfloat16

    h = jnp.dot(x_ref[...], w1_ref[...], preferred_element_type=f32)
    h = jnp.maximum(h + b1_ref[...], 0.0)

    h = jnp.dot(h.astype(bf16), w2_ref[...], preferred_element_type=f32)
    h = jnp.maximum(h + b2_ref[...], 0.0)

    h = jnp.dot(h.astype(bf16), w3_ref[...], preferred_element_type=f32)
    h = jnp.maximum(h + b3_ref[...], 0.0)

    # Final Linear(h_dim, 1): contract over H with the w4 row as the LHS so
    # the result is directly (1, TILE_B) -- lane-dense, no lane-width-1 result
    # and no masked partial stores on the output path.
    logit = jax.lax.dot_general(
        w4_ref[...], h.astype(bf16),
        dimension_numbers=(((1,), (1,)), ((), ())),
        preferred_element_type=f32)
    o_ref[...] = jax.nn.sigmoid(logit + b4_ref[...])


def discriminator_forward(x, params, *, tile_b=128):
    """Pallas forward of the WGAN Discriminator.  Returns shape [B] (= .view(-1)).

    For the real model (h_dim=800, large B) bump tile_b (256-1024); resident
    bf16 weights (~2.6 MB) + double-buffered tiles fit well inside the default
    scoped VMEM even on v7x (64 MiB physical).
    """
    B, d_in = x.shape
    h_dim = params["w1"].shape[1]

    # 128-align lane dims (MXU / vreg friendly) and the batch tile.
    D = _round_up(d_in, 128)
    H = _round_up(h_dim, 128)
    Bp = _round_up(B, tile_b)
    n_tiles = Bp // tile_b

    bf16, f32 = jnp.bfloat16, jnp.float32

    # Zero-padding is exact: padded x columns hit zero weight rows, padded
    # hidden units have zero weight+bias (so stay 0 through ReLU), and padded
    # w4 entries contribute 0 to the logit.  Padded batch rows are sliced off.
    xp = _pad_to(x.astype(f32), (Bp, D)).astype(bf16)
    w1 = _pad_to(params["w1"], (D, H)).astype(bf16)
    w2 = _pad_to(params["w2"], (H, H)).astype(bf16)
    w3 = _pad_to(params["w3"], (H, H)).astype(bf16)
    w4 = _pad_to(params["w4"].T, (1, H)).astype(bf16)   # (1, H) row
    b1 = _pad_to(params["b1"], (1, H)).astype(f32)
    b2 = _pad_to(params["b2"], (1, H)).astype(f32)
    b3 = _pad_to(params["b3"], (1, H)).astype(f32)
    b4 = params["b4"].astype(f32)                        # (1, 1)

    def resident(shape):
        # Constant index_map -> block is DMA'd once and stays VMEM-resident.
        return pl.BlockSpec(shape, lambda i: (0, 0))

    in_specs = [
        pl.BlockSpec((tile_b, D), lambda i: (i, 0)),   # x: tiled over batch
        resident((D, H)), resident((1, H)),            # w1, b1
        resident((H, H)), resident((1, H)),            # w2, b2
        resident((H, H)), resident((1, H)),            # w3, b3
        resident((1, H)), resident((1, 1)),            # w4 row, b4
    ]
    out_specs = pl.BlockSpec((1, tile_b), lambda i: (i, 0))

    flops = 2 * Bp * (D * H + H * H + H * H + H)
    bytes_accessed = (xp.size * 2
                      + (w1.size + w2.size + w3.size + w4.size) * 2
                      + (b1.size + b2.size + b3.size + b4.size) * 4
                      + Bp * 4)
    cost = pl.CostEstimate(flops=flops, transcendentals=Bp,
                           bytes_accessed=bytes_accessed)

    out = pl.pallas_call(
        _discriminator_kernel,
        out_shape=jax.ShapeDtypeStruct((n_tiles, tile_b), f32),
        grid=(n_tiles,),
        in_specs=in_specs,
        out_specs=out_specs,
        compiler_params=pltpu.CompilerParams(
            dimension_semantics=("parallel",)),
        cost_estimate=cost,
    )(xp, w1, b1, w2, b2, w3, b3, w4, b4)

    # Rows were assigned to (tile, lane) contiguously, so reshape(-1) restores
    # batch order; drop the padded rows.  Mirrors torch's .view(-1).
    return out.reshape(-1)[:B]


def init_params(key, d_in, h_dim):
    """Deterministic init matching torch.nn.Linear's U(-1/sqrt(fan_in), +1/sqrt(fan_in)).

    Weights stored transposed vs. torch ([in, out]); biases kept 2-D ([1, out]).
    """
    def linear(key, fan_in, fan_out):
        kw, kb = jax.random.split(key)
        bound = 1.0 / jnp.sqrt(fan_in)
        w = jax.random.uniform(kw, (fan_in, fan_out), jnp.float32, -bound, bound)
        b = jax.random.uniform(kb, (1, fan_out), jnp.float32, -bound, bound)
        return w, b

    k1, k2, k3, k4 = jax.random.split(key, 4)
    w1, b1 = linear(k1, d_in, h_dim)
    w2, b2 = linear(k2, h_dim, h_dim)
    w3, b3 = linear(k3, h_dim, h_dim)
    w4, b4 = linear(k4, h_dim, 1)
    return dict(w1=w1, b1=b1, w2=w2, b2=b2, w3=w3, b3=b3, w4=w4, b4=b4)


if __name__ == "__main__":
    # Small shapes consistent with the module:
    #   out_dim (input feature count) -> 16, h_dim (800 in original) -> 32, batch -> 8
    B, D_IN, H_DIM = 8, 16, 32

    key = jax.random.PRNGKey(0)
    k_x, k_p = jax.random.split(key)
    x = jax.random.normal(k_x, (B, D_IN), dtype=jnp.float32)
    params = init_params(k_p, D_IN, H_DIM)

    out = discriminator_forward(x, params)
    jax.block_until_ready(out)

    # Pure-JAX reference with the same bf16-matmul / f32-accumulate recipe.
    def ref(x, p):
        bf16, f32 = jnp.bfloat16, jnp.float32

        def mm(a, w):
            return jnp.dot(a.astype(bf16), w.astype(bf16),
                           preferred_element_type=f32)

        h = jnp.maximum(mm(x, p["w1"]) + p["b1"], 0.0)
        h = jnp.maximum(mm(h, p["w2"]) + p["b2"], 0.0)
        h = jnp.maximum(mm(h, p["w3"]) + p["b3"], 0.0)
        return jax.nn.sigmoid(mm(h, p["w4"]) + p["b4"]).reshape(-1)

    expected = ref(x, params)
    assert out.shape == (B,)
    assert jnp.allclose(out, expected, atol=2e-3, rtol=2e-3), (out, expected)

    print("KERNEL_OK")
</pallas_src>

<mosaic_0001>
module attributes {stable_mosaic.version = 11 : i64} {
  func.func @_discriminator_kernel(%arg0: i32, %arg1: memref<128x128xbf16, #tpu.memory_space<vmem>>, %arg2: memref<128x128xbf16, #tpu.memory_space<vmem>>, %arg3: memref<1x128xf32, #tpu.memory_space<vmem>>, %arg4: memref<128x128xbf16, #tpu.memory_space<vmem>>, %arg5: memref<1x128xf32, #tpu.memory_space<vmem>>, %arg6: memref<128x128xbf16, #tpu.memory_space<vmem>>, %arg7: memref<1x128xf32, #tpu.memory_space<vmem>>, %arg8: memref<1x128xbf16, #tpu.memory_space<vmem>>, %arg9: memref<1x1xf32, #tpu.memory_space<vmem>>, %arg10: memref<1x128xf32, #tpu.memory_space<vmem>>) attributes {dimension_semantics = [#tpu.dimension_semantics<parallel>], iteration_bounds = array<i64: 1>, scalar_prefetch = 0 : i64, scratch_operands = 0 : i64, tpu.core_type = #tpu.core_type<tc>, window_params = [{transform_indices = @transform_0, window_bounds = array<i64: 128, 128>}, {pipeline_mode = #tpu.pipeline_mode<synchronous>, transform_indices = @transform_1, window_bounds = array<i64: 128, 128>}, {pipeline_mode = #tpu.pipeline_mode<synchronous>, transform_indices = @transform_2, window_bounds = array<i64: 1, 128>}, {pipeline_mode = #tpu.pipeline_mode<synchronous>, transform_indices = @transform_3, window_bounds = array<i64: 128, 128>}, {pipeline_mode = #tpu.pipeline_mode<synchronous>, transform_indices = @transform_4, window_bounds = array<i64: 1, 128>}, {pipeline_mode = #tpu.pipeline_mode<synchronous>, transform_indices = @transform_5, window_bounds = array<i64: 128, 128>}, {pipeline_mode = #tpu.pipeline_mode<synchronous>, transform_indices = @transform_6, window_bounds = array<i64: 1, 128>}, {pipeline_mode = #tpu.pipeline_mode<synchronous>, transform_indices = @transform_7, window_bounds = array<i64: 1, 128>}, {pipeline_mode = #tpu.pipeline_mode<synchronous>, transform_indices = @transform_8, window_bounds = array<i64: 1, 1>}, {transform_indices = @transform_9, window_bounds = array<i64: 1, 128>}]} {
    %c0 = arith.constant 0 : index
    %c0_0 = arith.constant 0 : index
    %0 = vector.load %arg1[%c0, %c0_0] : memref<128x128xbf16, #tpu.memory_space<vmem>>, vector<128x128xbf16>
    %c0_1 = arith.constant 0 : index
    %c0_2 = arith.constant 0 : index
    %1 = vector.load %arg2[%c0_1, %c0_2] : memref<128x128xbf16, #tpu.memory_space<vmem>>, vector<128x128xbf16>
    %cst = arith.constant dense<0.000000e+00> : vector<128x128xf32>
    %2 = tpu.matmul %0, %1, %cst {dimension_numbers = #tpu.dot_dimension_numbers<[1], [0], [0], [1], [0, 0, 1, 1], [], []>} : vector<128x128xbf16>, vector<128x128xbf16>, vector<128x128xf32> -> vector<128x128xf32>
    %c0_3 = arith.constant 0 : index
    %c0_4 = arith.constant 0 : index
    %3 = vector.load %arg3[%c0_3, %c0_4] : memref<1x128xf32, #tpu.memory_space<vmem>>, vector<1x128xf32>
    %4 = vector.broadcast %3 : vector<1x128xf32> to vector<128x128xf32>
    %5 = arith.addf %2, %4 : vector<128x128xf32>
    %cst_5 = arith.constant 0.000000e+00 : f32
    %6 = vector.broadcast %cst_5 : f32 to vector<128x128xf32>
    %7 = arith.maximumf %5, %6 : vector<128x128xf32>
    %8 = arith.truncf %7 : vector<128x128xf32> to vector<128x128xbf16>
    %c0_6 = arith.constant 0 : index
    %c0_7 = arith.constant 0 : index
    %9 = vector.load %arg4[%c0_6, %c0_7] : memref<128x128xbf16, #tpu.memory_space<vmem>>, vector<128x128xbf16>
    %cst_8 = arith.constant dense<0.000000e+00> : vector<128x128xf32>
    %10 = tpu.matmul %8, %9, %cst_8 {dimension_numbers = #tpu.dot_dimension_numbers<[1], [0], [0], [1], [0, 0, 1, 1], [], []>} : vector<128x128xbf16>, vector<128x128xbf16>, vector<128x128xf32> -> vector<128x128xf32>
    %c0_9 = arith.constant 0 : index
    %c0_10 = arith.constant 0 : index
    %11 = vector.load %arg5[%c0_9, %c0_10] : memref<1x128xf32, #tpu.memory_space<vmem>>, vector<1x128xf32>
    %12 = vector.broadcast %11 : vector<1x128xf32> to vector<128x128xf32>
    %13 = arith.addf %10, %12 : vector<128x128xf32>
    %cst_11 = arith.constant 0.000000e+00 : f32
    %14 = vector.broadcast %cst_11 : f32 to vector<128x128xf32>
    %15 = arith.maximumf %13, %14 : vector<128x128xf32>
    %16 = arith.truncf %15 : vector<128x128xf32> to vector<128x128xbf16>
    %c0_12 = arith.constant 0 : index
    %c0_13 = arith.constant 0 : index
    %17 = vector.load %arg6[%c0_12, %c0_13] : memref<128x128xbf16, #tpu.memory_space<vmem>>, vector<128x128xbf16>
    %cst_14 = arith.constant dense<0.000000e+00> : vector<128x128xf32>
    %18 = tpu.matmul %16, %17, %cst_14 {dimension_numbers = #tpu.dot_dimension_numbers<[1], [0], [0], [1], [0, 0, 1, 1], [], []>} : vector<128x128xbf16>, vector<128x128xbf16>, vector<128x128xf32> -> vector<128x128xf32>
    %c0_15 = arith.constant 0 : index
    %c0_16 = arith.constant 0 : index
    %19 = vector.load %arg7[%c0_15, %c0_16] : memref<1x128xf32, #tpu.memory_space<vmem>>, vector<1x128xf32>
    %20 = vector.broadcast %19 : vector<1x128xf32> to vector<128x128xf32>
    %21 = arith.addf %18, %20 : vector<128x128xf32>
    %cst_17 = arith.constant 0.000000e+00 : f32
    %22 = vector.broadcast %cst_17 : f32 to vector<128x128xf32>
    %23 = arith.maximumf %21, %22 : vector<128x128xf32>
    %c0_18 = arith.constant 0 : index
    %c0_19 = arith.constant 0 : index
    %24 = vector.load %arg8[%c0_18, %c0_19] : memref<1x128xbf16, #tpu.memory_space<vmem>>, vector<1x128xbf16>
    %25 = arith.truncf %23 : vector<128x128xf32> to vector<128x128xbf16>
    %cst_20 = arith.constant dense<0.000000e+00> : vector<1x128xf32>
    %26 = tpu.matmul %24, %25, %cst_20 {dimension_numbers = #tpu.dot_dimension_numbers<[1], [1], [0], [0], [0, 0, 1, 0], [], []>} : vector<1x128xbf16>, vector<128x128xbf16>, vector<1x128xf32> -> vector<1x128xf32>
    %c0_21 = arith.constant 0 : index
    %c0_22 = arith.constant 0 : index
    %27 = vector.load %arg9[%c0_21, %c0_22] : memref<1x1xf32, #tpu.memory_space<vmem>>, vector<1x1xf32>
    %28 = vector.broadcast %27 : vector<1x1xf32> to vector<1x128xf32>
    %29 = arith.addf %26, %28 : vector<1x128xf32>
    %30 = arith.negf %29 : vector<1x128xf32>
    %31 = math.exp %30 : vector<1x128xf32>
    %cst_23 = arith.constant 1.000000e+00 : f32
    %32 = vector.broadcast %cst_23 : f32 to vector<1x128xf32>
    %33 = arith.addf %32, %31 : vector<1x128xf32>
    %34 = arith.divf %32, %33 : vector<1x128xf32>
    %c0_24 = arith.constant 0 : index
    %c0_25 = arith.constant 0 : index
    %35 = vector.load %arg10[%c0_24, %c0_25] : memref<1x128xf32, #tpu.memory_space<vmem>>, vector<1x128xf32>
    tpu.vector_store %arg10[%c0_24, %c0_25], %34 {strides = array<i32>} : memref<1x128xf32, #tpu.memory_space<vmem>>, vector<1x128xf32>,
    return
  }
  func.func @transform_0(%arg0: i32) -> (i32, i32) {
    %c0_i32 = arith.constant 0 : i32
    %c0_i32_0 = arith.constant 0 : i32
    return %arg0, %c0_i32 : i32, i32
  }
  func.func @transform_1(%arg0: i32) -> (i32, i32) {
    %c0_i32 = arith.constant 0 : i32
    %c0_i32_0 = arith.constant 0 : i32
    %c0_i32_1 = arith.constant 0 : i32
    return %c0_i32, %c0_i32_0 : i32, i32
  }
  func.func @transform_2(%arg0: i32) -> (i32, i32) {
    %c0_i32 = arith.constant 0 : i32
    %c0_i32_0 = arith.constant 0 : i32
    %c0_i32_1 = arith.constant 0 : i32
    return %c0_i32, %c0_i32_0 : i32, i32
  }
  func.func @transform_3(%arg0: i32) -> (i32, i32) {
    %c0_i32 = arith.constant 0 : i32
    %c0_i32_0 = arith.constant 0 : i32
    %c0_i32_1 = arith.constant 0 : i32
    return %c0_i32, %c0_i32_0 : i32, i32
  }
  func.func @transform_4(%arg0: i32) -> (i32, i32) {
    %c0_i32 = arith.constant 0 : i32
    %c0_i32_0 = arith.constant 0 : i32
    %c0_i32_1 = arith.constant 0 : i32
    return %c0_i32, %c0_i32_0 : i32, i32
  }
  func.func @transform_5(%arg0: i32) -> (i32, i32) {
    %c0_i32 = arith.constant 0 : i32
    %c0_i32_0 = arith.constant 0 : i32
    %c0_i32_1 = arith.constant 0 : i32
    return %c0_i32, %c0_i32_0 : i32, i32
  }
  func.func @transform_6(%arg0: i32) -> (i32, i32) {
    %c0_i32 = arith.constant 0 : i32
    %c0_i32_0 = arith.constant 0 : i32
    %c0_i32_1 = arith.constant 0 : i32
    return %c0_i32, %c0_i32_0 : i32, i32
  }
  func.func @transform_7(%arg0: i32) -> (i32, i32) {
    %c0_i32 = arith.constant 0 : i32
    %c0_i32_0 = arith.constant 0 : i32
    %c0_i32_1 = arith.constant 0 : i32
    return %c0_i32, %c0_i32_0 : i32, i32
  }
  func.func @transform_8(%arg0: i32) -> (i32, i32) {
    %c0_i32 = arith.constant 0 : i32
    %c0_i32_0 = arith.constant 0 : i32
    %c0_i32_1 = arith.constant 0 : i32
    return %c0_i32, %c0_i32_0 : i32, i32
  }
  func.func @transform_9(%arg0: i32) -> (i32, i32) {
    %c0_i32 = arith.constant 0 : i32
    %c0_i32_0 = arith.constant 0 : i32
    return %arg0, %c0_i32 : i32, i32
  }
}

</mosaic_0001>

<llo_original>
// kernel: tpu_custom_call.1
$region0: #{tpu_custom_call.1}
  #allocation0 [shape = 'u32[]', space=smem, size = 0x4, offset = 0x4, fixed_abs, tag = 'smem constant byte address 0x4 - core index']
  #allocation1 [shape = 'u32[144,128]{1,0:T(1,128)}', space=vmem, size = 0x12000, scoped, tag = 'internal scratch']
  #allocation2 [shape = 'f32[1,1]{1,0:T(1,128)S(1)}', space=vmem, size = 0x200, scoped, tag = 'scoped memory for tpu_custom_call.1']
  %s0 = inlined_call_operand.hbm [shape: bf16[128,128], index: 0, kind: input, shape index: {}]
  %s1 = inlined_call_operand.hbm [shape: bf16[128,128], index: 1, kind: input, shape index: {}]
  %s2 = inlined_call_operand.vmem [shape: f32[1,128], index: 2, kind: input, shape index: {}]
  %s3 = inlined_call_operand.hbm [shape: bf16[128,128], index: 3, kind: input, shape index: {}]
  %s4 = inlined_call_operand.vmem [shape: f32[1,128], index: 4, kind: input, shape index: {}]
  %s5 = inlined_call_operand.hbm [shape: bf16[128,128], index: 5, kind: input, shape index: {}]
  %s6 = inlined_call_operand.vmem [shape: f32[1,128], index: 6, kind: input, shape index: {}]
  %s7 = inlined_call_operand.vmem [shape: bf16[1,128], index: 7, kind: input, shape index: {}]
  %s8 = inlined_call_operand.<no memory space> [shape: f32[1,1], index: 8, kind: input, shape index: {}]
  %s9 = inlined_call_operand.hbm [shape: f32[1,128], index: 9, kind: output, shape index: {}]
  %s10 = sld [smem:[#allocation0]]
  $region62: #{tpu_custom_call.1} parent=0
    _
  %s12 = ssub.s32 1, %s10
  %s13 = scalar_select 0, %s12, %s10
  %v14 = vstv %s8
  %15 = vst [vmem:[#allocation2] sm:$0x1] %v14
  $region1: #{tpu_custom_call.1} parent=0
    #allocation3 [shape = 'u8[32768]{0}', space=vmem, size = 0x8000, scoped, tag = 'input window, operand 0, single buffered']
    #allocation4 [shape = 's32[1]{0}', space=sflag, size = 0x4, scoped, tag = 'scoped memory for tpu_custom_call.1']
    #allocation5 [shape = 's32[1]{0}', space=sflag, size = 0x4, scoped, tag = 'scoped memory for tpu_custom_call.1']
    #allocation6 [shape = 'u8[32768]{0}', space=vmem, size = 0x8000, scoped, tag = 'input window, operand 1, single buffered']
    #allocation7 [shape = 's32[1]{0}', space=sflag, size = 0x4, scoped, tag = 'scoped memory for tpu_custom_call.1']
    #allocation8 [shape = 'u8[32768]{0}', space=vmem, size = 0x8000, scoped, tag = 'input window, operand 3, single buffered']
    #allocation9 [shape = 'u8[32768]{0}', space=vmem, size = 0x8000, scoped, tag = 'input window, operand 5, single buffered']
    #allocation10 [shape = 's32[1]{0}', space=sflag, size = 0x4, scoped, tag = 'scoped memory for tpu_custom_call.1']
    #allocation11 [shape = 'u8[512]{0}', space=vmem, size = 0x400, scoped, tag = 'output window, operand 0, single buffered']
    %16 = vsyncpa [#allocation4], 0
    %17 = vsyncpa [#allocation7], 0
    %18 = vsyncpa [#allocation10], 0
    %19 = vsyncpa [#allocation5], 0
    // Predicated region
    $region2: #{tpu_custom_call.1} parent=1 // pred_check
      _
    $region3: #{tpu_custom_call.1} parent=1 // pred_check_branch
      %21 = sbr.rel (0) target = $region5
    $region4: #{tpu_custom_call.1} parent=1 // pred_region
      %s23 = ssub.s32 1024, 1024
      %24 = vsyncadd [#allocation4], %s23
      %s25 = sshll.u32 [#allocation3], 4
      %s26 = int_to_ptr.vmem [resolvable:$true] %s25
      %31 = dma.hbm_to_vmem [thread:$0]  %s0, 1024, %s26, [#allocation4], 64, 64, 4
    $region5: #{tpu_custom_call.1} parent=1 // pred_fallthru
      _
    // Predicated region
    $region6: #{tpu_custom_call.1} parent=1 // pred_check
      _
    $region7: #{tpu_custom_call.1} parent=1 // pred_check_branch
      %33 = sbr.rel (0) target = $region9
    $region8: #{tpu_custom_call.1} parent=1 // pred_region
      %s35 = ssub.s32 1024, 1024
      %36 = vsyncadd [#allocation7], %s35
      %s37 = sshll.u32 [#allocation6], 4
      %s38 = int_to_ptr.vmem [resolvable:$true] %s37
      %43 = dma.hbm_to_vmem [thread:$0]  %s1, 1024, %s38, [#allocation7], 64, 64, 4
    $region9: #{tpu_custom_call.1} parent=1 // pred_fallthru
      _
    // Predicated region
    $region10: #{tpu_custom_call.1} parent=1 // pred_check
      _
    $region11: #{tpu_custom_call.1} parent=1 // pred_check_branch
      %45 = sbr.rel (0) target = $region13
    $region12: #{tpu_custom_call.1} parent=1 // pred_region
      _
    $region13: #{tpu_custom_call.1} parent=1 // pred_fallthru
      _
    // Predicated region
    $region14: #{tpu_custom_call.1} parent=1 // pred_check
      _
    $region15: #{tpu_custom_call.1} parent=1 // pred_check_branch
      %47 = sbr.rel (0) target = $region17
    $region16: #{tpu_custom_call.1} parent=1 // pred_region
      %s49 = ssub.s32 1024, 1024
      %50 = vsyncadd [#allocation7], %s49
      %s51 = sshll.u32 [#allocation8], 4
      %s52 = int_to_ptr.vmem [resolvable:$true] %s51
      %57 = dma.hbm_to_vmem [thread:$0]  %s3, 1024, %s52, [#allocation7], 64, 64, 4
    $region17: #{tpu_custom_call.1} parent=1 // pred_fallthru
      _
    // Predicated region
    $region18: #{tpu_custom_call.1} parent=1 // pred_check
      _
    $region19: #{tpu_custom_call.1} parent=1 // pred_check_branch
      %59 = sbr.rel (0) target = $region21
    $region20: #{tpu_custom_call.1} parent=1 // pred_region
      _
    $region21: #{tpu_custom_call.1} parent=1 // pred_fallthru
      _
    // Predicated region
    $region22: #{tpu_custom_call.1} parent=1 // pred_check
      _
    $region23: #{tpu_custom_call.1} parent=1 // pred_check_branch
      %61 = sbr.rel (0) target = $region25
    $region24: #{tpu_custom_call.1} parent=1 // pred_region
      %s63 = ssub.s32 1024, 1024
      %64 = vsyncadd [#allocation10], %s63
      %s65 = sshll.u32 [#allocation9], 4
      %s66 = int_to_ptr.vmem [resolvable:$true] %s65
      %71 = dma.hbm_to_vmem [thread:$0]  %s5, 1024, %s66, [#allocation10], 64, 64, 4
    $region25: #{tpu_custom_call.1} parent=1 // pred_fallthru
      _
    // Predicated region
    $region26: #{tpu_custom_call.1} parent=1 // pred_check
      _
    $region27: #{tpu_custom_call.1} parent=1 // pred_check_branch
      %73 = sbr.rel (0) target = $region29
    $region28: #{tpu_custom_call.1} parent=1 // pred_region
      _
    $region29: #{tpu_custom_call.1} parent=1 // pred_fallthru
      _
    // Predicated region
    $region30: #{tpu_custom_call.1} parent=1 // pred_check
      _
    $region31: #{tpu_custom_call.1} parent=1 // pred_check_branch
      %75 = sbr.rel (0) target = $region33
    $region32: #{tpu_custom_call.1} parent=1 // pred_region
      _
    $region33: #{tpu_custom_call.1} parent=1 // pred_fallthru
      _
    // Predicated region
    $region34: #{tpu_custom_call.1} parent=1 // pred_check
      _
    $region35: #{tpu_custom_call.1} parent=1 // pred_check_branch
      %77 = sbr.rel (0) target = $region37
    $region36: #{tpu_custom_call.1} parent=1 // pred_region
      _
    $region37: #{tpu_custom_call.1} parent=1 // pred_fallthru
      _
    // Predicated region
    $region38: #{tpu_custom_call.1} parent=1 // pred_check
      _
    $region39: #{tpu_custom_call.1} parent=1 // pred_check_branch
      %79 = sbr.rel (0) target = $region41
    $region40: #{tpu_custom_call.1} parent=1 // pred_region
      %80 = dma.done [#allocation4], 1024
    $region41: #{tpu_custom_call.1} parent=1 // pred_fallthru
      _
    // Predicated region
    $region42: #{tpu_custom_call.1} parent=1 // pred_check
      _
    $region43: #{tpu_custom_call.1} parent=1 // pred_check_branch
      %82 = sbr.rel (0) target = $region45
    $region44: #{tpu_custom_call.1} parent=1 // pred_region
      %83 = dma.done [#allocation7], 1024
    $region45: #{tpu_custom_call.1} parent=1 // pred_fallthru
      _
    // Predicated region
    $region46: #{tpu_custom_call.1} parent=1 // pred_check
      _
    $region47: #{tpu_custom_call.1} parent=1 // pred_check_branch
      %85 = sbr.rel (0) target = $region49
    $region48: #{tpu_custom_call.1} parent=1 // pred_region
      %86 = dma.done [#allocation7], 1024
    $region49: #{tpu_custom_call.1} parent=1 // pred_fallthru
      _
    // Predicated region
    $region50: #{tpu_custom_call.1} parent=1 // pred_check
      _
    $region51: #{tpu_custom_call.1} parent=1 // pred_check_branch
      %88 = sbr.rel (0) target = $region53
    $region52: #{tpu_custom_call.1} parent=1 // pred_region
      %89 = dma.done [#allocation10], 1024
    $region53: #{tpu_custom_call.1} parent=1 // pred_fallthru
      _
    %v91 = vld [vmem:[#allocation3] sm:$0xf]
    %v92 = vld [vmem:[#allocation3 + $0x4] sm:$0xf]
    %v93 = vld [vmem:[#allocation3 + $0x8] sm:$0xf]
    %v94 = vld [vmem:[#allocation3 + $0xc] sm:$0xf]
    %v95 = vld [vmem:[#allocation3 + $0x10] sm:$0xf]
    %v96 = vld [vmem:[#allocation3 + $0x14] sm:$0xf]
    %v97 = vld [vmem:[#allocation3 + $0x18] sm:$0xf]
    %v98 = vld [vmem:[#allocation3 + $0x1c] sm:$0xf]
    %v99 = vld [vmem:[#allocation3 + $0x20] sm:$0xf]
    %v100 = vld [vmem:[#allocation3 + $0x24] sm:$0xf]
    %v101 = vld [vmem:[#allocation3 + $0x28] sm:$0xf]
    %v102 = vld [vmem:[#allocation3 + $0x2c] sm:$0xf]
    %v103 = vld [vmem:[#allocation3 + $0x30] sm:$0xf]
    %v104 = vld [vmem:[#allocation3 + $0x34] sm:$0xf]
    %v105 = vld [vmem:[#allocation3 + $0x38] sm:$0xf]
    %v106 = vld [vmem:[#allocation3 + $0x3c] sm:$0xf]
    %v107 = vld [vmem:[#allocation6] sm:$0xf]
    %v108 = vld [vmem:[#allocation6 + $0x4] sm:$0xf]
    %v109 = vld [vmem:[#allocation6 + $0x8] sm:$0xf]
    %v110 = vld [vmem:[#allocation6 + $0xc] sm:$0xf]
    %v111 = vld [vmem:[#allocation6 + $0x10] sm:$0xf]
    %v112 = vld [vmem:[#allocation6 + $0x14] sm:$0xf]
    %v113 = vld [vmem:[#allocation6 + $0x18] sm:$0xf]
    %v114 = vld [vmem:[#allocation6 + $0x1c] sm:$0xf]
    %v115 = vld [vmem:[#allocation6 + $0x20] sm:$0xf]
    %v116 = vld [vmem:[#allocation6 + $0x24] sm:$0xf]
    %v117 = vld [vmem:[#allocation6 + $0x28] sm:$0xf]
    %v118 = vld [vmem:[#allocation6 + $0x2c] sm:$0xf]
    %v119 = vld [vmem:[#allocation6 + $0x30] sm:$0xf]
    %v120 = vld [vmem:[#allocation6 + $0x34] sm:$0xf]
    %v121 = vld [vmem:[#allocation6 + $0x38] sm:$0xf]
    %v122 = vld [vmem:[#allocation6 + $0x3c] sm:$0xf]
    %v123 = vld [vmem:[%s2] sm:$0x1]
    %v125 = vlaneseq
    %v126 = vshrl.u32 %v125, 7
    %v127 = vsub.s32 0, %v126
    %v128 = vrot.slane %v123, %v127
    %v146 = vunpack.c.l.b16 %v91
    %v147 = vunpack.c.l.b16 %v92
    %v148 = vunpack.c.l.b16 %v93
    %v149 = vunpack.c.l.b16 %v94
    %v150 = vunpack.c.l.b16 %v95
    %v151 = vunpack.c.l.b16 %v96
    %v152 = vunpack.c.l.b16 %v97
    %v153 = vunpack.c.l.b16 %v98
    %v154 = vunpack.c.l.b16 %v99
    %v155 = vunpack.c.l.b16 %v100
    %v156 = vunpack.c.l.b16 %v101
    %v157 = vunpack.c.l.b16 %v102
    %v158 = vunpack.c.l.b16 %v103
    %v159 = vunpack.c.l.b16 %v104
    %v160 = vunpack.c.l.b16 %v105
    %v161 = vunpack.c.l.b16 %v106
    %v162 = vpack.c.b16 %v147, %v146
    %v163 = vpack.c.b16 %v149, %v148
    %v164 = vpack.c.b16 %v151, %v150
    %v165 = vpack.c.b16 %v153, %v152
    %v166 = vpack.c.b16 %v155, %v154
    %v167 = vpack.c.b16 %v157, %v156
    %v168 = vpack.c.b16 %v159, %v158
    %v169 = vpack.c.b16 %v161, %v160
    %v194 = vunpack.c.l.b16 %v107
    %v195 = vunpack.c.l.b16 %v108
    %v196 = vunpack.c.l.b16 %v109
    %v197 = vunpack.c.l.b16 %v110
    %v198 = vunpack.c.l.b16 %v111
    %v199 = vunpack.c.l.b16 %v112
    %v200 = vunpack.c.l.b16 %v113
    %v201 = vunpack.c.l.b16 %v114
    %v202 = vunpack.c.l.b16 %v115
    %v203 = vunpack.c.l.b16 %v116
    %v204 = vunpack.c.l.b16 %v117
    %v205 = vunpack.c.l.b16 %v118
    %v206 = vunpack.c.l.b16 %v119
    %v207 = vunpack.c.l.b16 %v120
    %v208 = vunpack.c.l.b16 %v121
    %v209 = vunpack.c.l.b16 %v122
    %v210 = vpack.c.b16 %v195, %v194
    %v211 = vpack.c.b16 %v197, %v196
    %v212 = vpack.c.b16 %v199, %v198
    %v213 = vpack.c.b16 %v201, %v200
    %v214 = vpack.c.b16 %v203, %v202
    %v215 = vpack.c.b16 %v205, %v204
    %v216 = vpack.c.b16 %v207, %v206
    %v217 = vpack.c.b16 %v209, %v208
    %226 = vmatprep.subr.bf16.mxu0 0
    %227 = vmatpush1.bf16.msra.mxu0 %v210
    %228 = vmatprep.subr.bf16.mxu0 0
    %229 = vmatpush1.bf16.msra.mxu0 %v211
    %230 = vmatprep.subr.bf16.mxu0 0
    %231 = vmatpush1.bf16.msra.mxu0 %v212
    %232 = vmatprep.subr.bf16.mxu0 0
    %233 = vmatpush1.bf16.msra.mxu0 %v213
    %234 = vmatprep.subr.bf16.mxu0 0
    %235 = vmatpush1.bf16.msra.mxu0 %v214
    %236 = vmatprep.subr.bf16.mxu0 0
    %237 = vmatpush1.bf16.msra.mxu0 %v215
    %238 = vmatprep.subr.bf16.mxu0 0
    %239 = vmatpush1.bf16.msra.mxu0 %v216
    %240 = vmatprep.subr.bf16.mxu0 0
    %241 = vmatpush1.bf16.msra.mxu0 %v217
    %242 = vmatprep.subr.bf16.mxu0 0
    %243 = vmatpush1.bf16.msra.mxu0 0
    %244 = vmatprep.subr.bf16.mxu0 0
    %245 = vmatpush1.bf16.msra.mxu0 0
    %246 = vmatprep.subr.bf16.mxu0 0
    %247 = vmatpush1.bf16.msra.mxu0 0
    %248 = vmatprep.subr.bf16.mxu0 0
    %249 = vmatpush1.bf16.msra.mxu0 0
    %250 = vmatprep.subr.bf16.mxu0 0
    %251 = vmatpush1.bf16.msra.mxu0 0
    %252 = vmatprep.subr.bf16.mxu0 0
    %253 = vmatpush1.bf16.msra.mxu0 0
    %254 = vmatprep.subr.bf16.mxu0 0
    %255 = vmatpush1.bf16.msra.mxu0 0
    %256 = vmatprep.subr.bf16.mxu0 0
    %257 = vmatpush1.bf16.msra.mxu0 0
    %258 = vmatprep.mubr.bf16.mxu0 0
    %259 = vmatmul.mubr.bf16.gmra.mrb[0].mxu0 %v162
    %v260 = vpop.f32.mrb[0].mxu0
    %v261 = vadd.f32 %v128, %v260
    %v262 = vpop.f32.mrb[0].mxu0
    %v263 = vpop.f32.mrb[0].mxu0
    %v264 = vadd.f32 %v128, %v263
    %v265 = vpop.f32.mrb[0].mxu0
    %266 = vmatprep.mubr.bf16.mxu0 0
    %267 = vmatmul.mubr.bf16.gmra.mrb[0].mxu0 %v163
    %v268 = vpop.f32.mrb[0].mxu0
    %v269 = vadd.f32 %v128, %v268
    %v270 = vpop.f32.mrb[0].mxu0
    %v271 = vpop.f32.mrb[0].mxu0
    %v272 = vadd.f32 %v128, %v271
    %v273 = vpop.f32.mrb[0].mxu0
    %274 = vmatprep.mubr.bf16.mxu0 0
    %275 = vmatmul.mubr.bf16.gmra.mrb[0].mxu0 %v164
    %v276 = vpop.f32.mrb[0].mxu0
    %v277 = vadd.f32 %v128, %v276
    %v278 = vpop.f32.mrb[0].mxu0
    %v279 = vpop.f32.mrb[0].mxu0
    %v280 = vadd.f32 %v128, %v279
    %v281 = vpop.f32.mrb[0].mxu0
    %282 = vmatprep.mubr.bf16.mxu0 0
    %283 = vmatmul.mubr.bf16.gmra.mrb[0].mxu0 %v165
    %v284 = vpop.f32.mrb[0].mxu0
    %v285 = vadd.f32 %v128, %v284
    %v286 = vpop.f32.mrb[0].mxu0
    %v287 = vpop.f32.mrb[0].mxu0
    %v288 = vadd.f32 %v128, %v287
    %v289 = vpop.f32.mrb[0].mxu0
    %290 = vmatprep.mubr.bf16.mxu0 0
    %291 = vmatmul.mubr.bf16.gmra.mrb[0].mxu0 %v166
    %v292 = vpop.f32.mrb[0].mxu0
    %v293 = vadd.f32 %v128, %v292
    %v294 = vpop.f32.mrb[0].mxu0
    %v295 = vpop.f32.mrb[0].mxu0
    %v296 = vadd.f32 %v128, %v295
    %v297 = vpop.f32.mrb[0].mxu0
    %298 = vmatprep.mubr.bf16.mxu0 0
    %299 = vmatmul.mubr.bf16.gmra.mrb[0].mxu0 %v167
    %v300 = vpop.f32.mrb[0].mxu0
    %v301 = vadd.f32 %v128, %v300
    %v302 = vpop.f32.mrb[0].mxu0
    %v303 = vpop.f32.mrb[0].mxu0
    %v304 = vadd.f32 %v128, %v303
    %v305 = vpop.f32.mrb[0].mxu0
    %306 = vmatprep.mubr.bf16.mxu0 0
    %307 = vmatmul.mubr.bf16.gmra.mrb[0].mxu0 %v168
    %v308 = vpop.f32.mrb[0].mxu0
    %v309 = vadd.f32 %v128, %v308
    %v310 = vpop.f32.mrb[0].mxu0
    %v311 = vpop.f32.mrb[0].mxu0
    %v312 = vadd.f32 %v128, %v311
    %v313 = vpop.f32.mrb[0].mxu0
    %314 = vmatprep.mubr.bf16.mxu0 0
    %315 = vmatmul.mubr.bf16.gmra.mrb[0].mxu0 %v169
    %v316 = vpop.f32.mrb[0].mxu0
    %v317 = vadd.f32 %v128, %v316
    %v318 = vpop.f32.mrb[0].mxu0
    %v319 = vpop.f32.mrb[0].mxu0
    %v320 = vadd.f32 %v128, %v319
    %v321 = vpop.f32.mrb[0].mxu0
    %322 = vdwg.mxu0
    %v323 = vmax.f32 %v261, 0.0
    %v324 = vmax.f32 %v264, 0.0
    %v325 = vmax.f32 %v269, 0.0
    %v326 = vmax.f32 %v272, 0.0
    %v327 = vmax.f32 %v277, 0.0
    %v328 = vmax.f32 %v280, 0.0
    %v329 = vmax.f32 %v285, 0.0
    %v330 = vmax.f32 %v288, 0.0
    %v331 = vmax.f32 %v293, 0.0
    %v332 = vmax.f32 %v296, 0.0
    %v333 = vmax.f32 %v301, 0.0
    %v334 = vmax.f32 %v304, 0.0
    %v335 = vmax.f32 %v309, 0.0
    %v336 = vmax.f32 %v312, 0.0
    %v337 = vmax.f32 %v317, 0.0
    %v338 = vmax.f32 %v320, 0.0
    %v339 = vpack.c.bf16 %v324, %v323
    %v340 = vpack.c.bf16 %v326, %v325
    %v341 = vpack.c.bf16 %v328, %v327
    %v342 = vpack.c.bf16 %v330, %v329
    %v343 = vpack.c.bf16 %v332, %v331
    %v344 = vpack.c.bf16 %v334, %v333
    %v345 = vpack.c.bf16 %v336, %v335
    %v346 = vpack.c.bf16 %v338, %v337
    %v347 = vld [vmem:[#allocation8] sm:$0xf]
    %v348 = vld [vmem:[#allocation8 + $0x4] sm:$0xf]
    %v349 = vld [vmem:[#allocation8 + $0x8] sm:$0xf]
    %v350 = vld [vmem:[#allocation8 + $0xc] sm:$0xf]
    %v351 = vld [vmem:[#allocation8 + $0x10] sm:$0xf]
    %v352 = vld [vmem:[#allocation8 + $0x14] sm:$0xf]
    %v353 = vld [vmem:[#allocation8 + $0x18] sm:$0xf]
    %v354 = vld [vmem:[#allocation8 + $0x1c] sm:$0xf]
    %v355 = vld [vmem:[#allocation8 + $0x20] sm:$0xf]
    %v356 = vld [vmem:[#allocation8 + $0x24] sm:$0xf]
    %v357 = vld [vmem:[#allocation8 + $0x28] sm:$0xf]
    %v358 = vld [vmem:[#allocation8 + $0x2c] sm:$0xf]
    %v359 = vld [vmem:[#allocation8 + $0x30] sm:$0xf]
    %v360 = vld [vmem:[#allocation8 + $0x34] sm:$0xf]
    %v361 = vld [vmem:[#allocation8 + $0x38] sm:$0xf]
    %v362 = vld [vmem:[#allocation8 + $0x3c] sm:$0xf]
    %v363 = vld [vmem:[%s4] sm:$0x1]
    %v365 = vlaneseq
    %v366 = vshrl.u32 %v365, 7
    %v367 = vsub.s32 0, %v366
    %v368 = vrot.slane %v363, %v367
    %v386 = vunpack.c.l.b16 %v347
    %v387 = vunpack.c.l.b16 %v348
    %v388 = vunpack.c.l.b16 %v349
    %v389 = vunpack.c.l.b16 %v350
    %v390 = vunpack.c.l.b16 %v351
    %v391 = vunpack.c.l.b16 %v352
    %v392 = vunpack.c.l.b16 %v353
    %v393 = vunpack.c.l.b16 %v354
    %v394 = vunpack.c.l.b16 %v355
    %v395 = vunpack.c.l.b16 %v356
    %v396 = vunpack.c.l.b16 %v357
    %v397 = vunpack.c.l.b16 %v358
    %v398 = vunpack.c.l.b16 %v359
    %v399 = vunpack.c.l.b16 %v360
    %v400 = vunpack.c.l.b16 %v361
    %v401 = vunpack.c.l.b16 %v362
    %v402 = vpack.c.b16 %v387, %v386
    %v403 = vpack.c.b16 %v389, %v388
    %v404 = vpack.c.b16 %v391, %v390
    %v405 = vpack.c.b16 %v393, %v392
    %v406 = vpack.c.b16 %v395, %v394
    %v407 = vpack.c.b16 %v397, %v396
    %v408 = vpack.c.b16 %v399, %v398
    %v409 = vpack.c.b16 %v401, %v400
    %418 = vmatprep.subr.bf16.mxu0 0
    %419 = vmatpush1.bf16.msra.mxu0 %v402
    %420 = vmatprep.subr.bf16.mxu0 0
    %421 = vmatpush1.bf16.msra.mxu0 %v403
    %422 = vmatprep.subr.bf16.mxu0 0
    %423 = vmatpush1.bf16.msra.mxu0 %v404
    %424 = vmatprep.subr.bf16.mxu0 0
    %425 = vmatpush1.bf16.msra.mxu0 %v405
    %426 = vmatprep.subr.bf16.mxu0 0
    %427 = vmatpush1.bf16.msra.mxu0 %v406
    %428 = vmatprep.subr.bf16.mxu0 0
    %429 = vmatpush1.bf16.msra.mxu0 %v407
    %430 = vmatprep.subr.bf16.mxu0 0
    %431 = vmatpush1.bf16.msra.mxu0 %v408
    %432 = vmatprep.subr.bf16.mxu0 0
    %433 = vmatpush1.bf16.msra.mxu0 %v409
    %434 = vmatprep.subr.bf16.mxu0 0
    %435 = vmatpush1.bf16.msra.mxu0 0
    %436 = vmatprep.subr.bf16.mxu0 0
    %437 = vmatpush1.bf16.msra.mxu0 0
    %438 = vmatprep.subr.bf16.mxu0 0
    %439 = vmatpush1.bf16.msra.mxu0 0
    %440 = vmatprep.subr.bf16.mxu0 0
    %441 = vmatpush1.bf16.msra.mxu0 0
    %442 = vmatprep.subr.bf16.mxu0 0
    %443 = vmatpush1.bf16.msra.mxu0 0
    %444 = vmatprep.subr.bf16.mxu0 0
    %445 = vmatpush1.bf16.msra.mxu0 0
    %446 = vmatprep.subr.bf16.mxu0 0
    %447 = vmatpush1.bf16.msra.mxu0 0
    %448 = vmatprep.subr.bf16.mxu0 0
    %449 = vmatpush1.bf16.msra.mxu0 0
    %450 = vmatprep.mubr.bf16.mxu0 0
    %451 = vmatmul.mubr.bf16.gmra.mrb[0].mxu0 %v339
    %v452 = vpop.f32.mrb[0].mxu0
    %v453 = vadd.f32 %v368, %v452
    %v454 = vpop.f32.mrb[0].mxu0
    %v455 = vpop.f32.mrb[0].mxu0
    %v456 = vadd.f32 %v368, %v455
    %v457 = vpop.f32.mrb[0].mxu0
    %458 = vmatprep.mubr.bf16.mxu0 0
    %459 = vmatmul.mubr.bf16.gmra.mrb[0].mxu0 %v340
    %v460 = vpop.f32.mrb[0].mxu0
    %v461 = vadd.f32 %v368, %v460
    %v462 = vpop.f32.mrb[0].mxu0
    %v463 = vpop.f32.mrb[0].mxu0
    %v464 = vadd.f32 %v368, %v463
    %v465 = vpop.f32.mrb[0].mxu0
    %466 = vmatprep.mubr.bf16.mxu0 0
    %467 = vmatmul.mubr.bf16.gmra.mrb[0].mxu0 %v341
    %v468 = vpop.f32.mrb[0].mxu0
    %v469 = vadd.f32 %v368, %v468
    %v470 = vpop.f32.mrb[0].mxu0
    %v471 = vpop.f32.mrb[0].mxu0
    %v472 = vadd.f32 %v368, %v471
    %v473 = vpop.f32.mrb[0].mxu0
    %474 = vmatprep.mubr.bf16.mxu0 0
    %475 = vmatmul.mubr.bf16.gmra.mrb[0].mxu0 %v342
    %v476 = vpop.f32.mrb[0].mxu0
    %v477 = vadd.f32 %v368, %v476
    %v478 = vpop.f32.mrb[0].mxu0
    %v479 = vpop.f32.mrb[0].mxu0
    %v480 = vadd.f32 %v368, %v479
    %v481 = vpop.f32.mrb[0].mxu0
    %482 = vmatprep.mubr.bf16.mxu0 0
    %483 = vmatmul.mubr.bf16.gmra.mrb[0].mxu0 %v343
    %v484 = vpop.f32.mrb[0].mxu0
    %v485 = vadd.f32 %v368, %v484
    %v486 = vpop.f32.mrb[0].mxu0
    %v487 = vpop.f32.mrb[0].mxu0
    %v488 = vadd.f32 %v368, %v487
    %v489 = vpop.f32.mrb[0].mxu0
    %490 = vmatprep.mubr.bf16.mxu0 0
    %491 = vmatmul.mubr.bf16.gmra.mrb[0].mxu0 %v344
    %v492 = vpop.f32.mrb[0].mxu0
    %v493 = vadd.f32 %v368, %v492
    %v494 = vpop.f32.mrb[0].mxu0
    %v495 = vpop.f32.mrb[0].mxu0
    %v496 = vadd.f32 %v368, %v495
    %v497 = vpop.f32.mrb[0].mxu0
    %498 = vmatprep.mubr.bf16.mxu0 0
    %499 = vmatmul.mubr.bf16.gmra.mrb[0].mxu0 %v345
    %v500 = vpop.f32.mrb[0].mxu0
    %v501 = vadd.f32 %v368, %v500
    %v502 = vpop.f32.mrb[0].mxu0
    %v503 = vpop.f32.mrb[0].mxu0
    %v504 = vadd.f32 %v368, %v503
    %v505 = vpop.f32.mrb[0].mxu0
    %506 = vmatprep.mubr.bf16.mxu0 0
    %507 = vmatmul.mubr.bf16.gmra.mrb[0].mxu0 %v346
    %v508 = vpop.f32.mrb[0].mxu0
    %v509 = vadd.f32 %v368, %v508
    %v510 = vpop.f32.mrb[0].mxu0
    %v511 = vpop.f32.mrb[0].mxu0
    %v512 = vadd.f32 %v368, %v511
    %v513 = vpop.f32.mrb[0].mxu0
    %514 = vdwg.mxu0
    %v515 = vmax.f32 %v453, 0.0
    %v516 = vmax.f32 %v456, 0.0
    %v517 = vmax.f32 %v461, 0.0
    %v518 = vmax.f32 %v464, 0.0
    %v519 = vmax.f32 %v469, 0.0
    %v520 = vmax.f32 %v472, 0.0
    %v521 = vmax.f32 %v477, 0.0
    %v522 = vmax.f32 %v480, 0.0
    %v523 = vmax.f32 %v485, 0.0
    %v524 = vmax.f32 %v488, 0.0
    %v525 = vmax.f32 %v493, 0.0
    %v526 = vmax.f32 %v496, 0.0
    %v527 = vmax.f32 %v501, 0.0
    %v528 = vmax.f32 %v504, 0.0
    %v529 = vmax.f32 %v509, 0.0
    %v530 = vmax.f32 %v512, 0.0
    %v531 = vpack.c.bf16 %v516, %v515
    %v532 = vpack.c.bf16 %v518, %v517
    %v533 = vpack.c.bf16 %v520, %v519
    %v534 = vpack.c.bf16 %v522, %v521
    %v535 = vpack.c.bf16 %v524, %v523
    %v536 = vpack.c.bf16 %v526, %v525
    %v537 = vpack.c.bf16 %v528, %v527
    %v538 = vpack.c.bf16 %v530, %v529
    %v539 = vld [vmem:[#allocation9] sm:$0xf]
    %v540 = vld [vmem:[#allocation9 + $0x4] sm:$0xf]
    %v541 = vld [vmem:[#allocation9 + $0x8] sm:$0xf]
    %v542 = vld [vmem:[#allocation9 + $0xc] sm:$0xf]
    %v543 = vld [vmem:[#allocation9 + $0x10] sm:$0xf]
    %v544 = vld [vmem:[#allocation9 + $0x14] sm:$0xf]
    %v545 = vld [vmem:[#allocation9 + $0x18] sm:$0xf]
    %v546 = vld [vmem:[#allocation9 + $0x1c] sm:$0xf]
    %v547 = vld [vmem:[#allocation9 + $0x20] sm:$0xf]
    %v548 = vld [vmem:[#allocation9 + $0x24] sm:$0xf]
    %v549 = vld [vmem:[#allocation9 + $0x28] sm:$0xf]
    %v550 = vld [vmem:[#allocation9 + $0x2c] sm:$0xf]
    %v551 = vld [vmem:[#allocation9 + $0x30] sm:$0xf]
    %v552 = vld [vmem:[#allocation9 + $0x34] sm:$0xf]
    %v553 = vld [vmem:[#allocation9 + $0x38] sm:$0xf]
    %v554 = vld [vmem:[#allocation9 + $0x3c] sm:$0xf]
    %v555 = vld [vmem:[%s6] sm:$0x1]
    %v557 = vlaneseq
    %v558 = vshrl.u32 %v557, 7
    %v559 = vsub.s32 0, %v558
    %v560 = vrot.slane %v555, %v559
    %v578 = vunpack.c.l.b16 %v539
    %v579 = vunpack.c.l.b16 %v540
    %v580 = vunpack.c.l.b16 %v541
    %v581 = vunpack.c.l.b16 %v542
    %v582 = vunpack.c.l.b16 %v543
    %v583 = vunpack.c.l.b16 %v544
    %v584 = vunpack.c.l.b16 %v545
    %v585 = vunpack.c.l.b16 %v546
    %v586 = vunpack.c.l.b16 %v547
    %v587 = vunpack.c.l.b16 %v548
    %v588 = vunpack.c.l.b16 %v549
    %v589 = vunpack.c.l.b16 %v550
    %v590 = vunpack.c.l.b16 %v551
    %v591 = vunpack.c.l.b16 %v552
    %v592 = vunpack.c.l.b16 %v553
    %v593 = vunpack.c.l.b16 %v554
    %v594 = vpack.c.b16 %v579, %v578
    %v595 = vpack.c.b16 %v581, %v580
    %v596 = vpack.c.b16 %v583, %v582
    %v597 = vpack.c.b16 %v585, %v584
    %v598 = vpack.c.b16 %v587, %v586
    %v599 = vpack.c.b16 %v589, %v588
    %v600 = vpack.c.b16 %v591, %v590
    %v601 = vpack.c.b16 %v593, %v592
    %610 = vmatprep.subr.bf16.mxu0 0
    %611 = vmatpush1.bf16.msra.mxu0 %v594
    %612 = vmatprep.subr.bf16.mxu0 0
    %613 = vmatpush1.bf16.msra.mxu0 %v595
    %614 = vmatprep.subr.bf16.mxu0 0
    %615 = vmatpush1.bf16.msra.mxu0 %v596
    %616 = vmatprep.subr.bf16.mxu0 0
    %617 = vmatpush1.bf16.msra.mxu0 %v597
    %618 = vmatprep.subr.bf16.mxu0 0
    %619 = vmatpush1.bf16.msra.mxu0 %v598
    %620 = vmatprep.subr.bf16.mxu0 0
    %621 = vmatpush1.bf16.msra.mxu0 %v599
    %622 = vmatprep.subr.bf16.mxu0 0
    %623 = vmatpush1.bf16.msra.mxu0 %v600
    %624 = vmatprep.subr.bf16.mxu0 0
    %625 = vmatpush1.bf16.msra.mxu0 %v601
    %626 = vmatprep.subr.bf16.mxu0 0
    %627 = vmatpush1.bf16.msra.mxu0 0
    %628 = vmatprep.subr.bf16.mxu0 0
    %629 = vmatpush1.bf16.msra.mxu0 0
    %630 = vmatprep.subr.bf16.mxu0 0
    %631 = vmatpush1.bf16.msra.mxu0 0
    %632 = vmatprep.subr.bf16.mxu0 0
    %633 = vmatpush1.bf16.msra.mxu0 0
    %634 = vmatprep.subr.bf16.mxu0 0
    %635 = vmatpush1.bf16.msra.mxu0 0
    %636 = vmatprep.subr.bf16.mxu0 0
    %637 = vmatpush1.bf16.msra.mxu0 0
    %638 = vmatprep.subr.bf16.mxu0 0
    %639 = vmatpush1.bf16.msra.mxu0 0
    %640 = vmatprep.subr.bf16.mxu0 0
    %641 = vmatpush1.bf16.msra.mxu0 0
    %642 = vmatprep.mubr.bf16.mxu0 0
    %643 = vmatmul.mubr.bf16.gmra.mrb[0].mxu0 %v531
    %v644 = vpop.f32.mrb[0].mxu0
    %v645 = vadd.f32 %v560, %v644
    %v646 = vpop.f32.mrb[0].mxu0
    %v647 = vpop.f32.mrb[0].mxu0
    %v648 = vadd.f32 %v560, %v647
    %v649 = vpop.f32.mrb[0].mxu0
    %650 = vmatprep.mubr.bf16.mxu0 0
    %651 = vmatmul.mubr.bf16.gmra.mrb[0].mxu0 %v532
    %v652 = vpop.f32.mrb[0].mxu0
    %v653 = vadd.f32 %v560, %v652
    %v654 = vpop.f32.mrb[0].mxu0
    %v655 = vpop.f32.mrb[0].mxu0
    %v656 = vadd.f32 %v560, %v655
    %v657 = vpop.f32.mrb[0].mxu0
    %658 = vmatprep.mubr.bf16.mxu0 0
    %659 = vmatmul.mubr.bf16.gmra.mrb[0].mxu0 %v533
    %v660 = vpop.f32.mrb[0].mxu0
    %v661 = vadd.f32 %v560, %v660
    %v662 = vpop.f32.mrb[0].mxu0
    %v663 = vpop.f32.mrb[0].mxu0
    %v664 = vadd.f32 %v560, %v663
    %v665 = vpop.f32.mrb[0].mxu0
    %666 = vmatprep.mubr.bf16.mxu0 0
    %667 = vmatmul.mubr.bf16.gmra.mrb[0].mxu0 %v534
    %v668 = vpop.f32.mrb[0].mxu0
    %v669 = vadd.f32 %v560, %v668
    %v670 = vpop.f32.mrb[0].mxu0
    %v671 = vpop.f32.mrb[0].mxu0
    %v672 = vadd.f32 %v560, %v671
    %v673 = vpop.f32.mrb[0].mxu0
    %674 = vmatprep.mubr.bf16.mxu0 0
    %675 = vmatmul.mubr.bf16.gmra.mrb[0].mxu0 %v535
    %v676 = vpop.f32.mrb[0].mxu0
    %v677 = vadd.f32 %v560, %v676
    %v678 = vpop.f32.mrb[0].mxu0
    %v679 = vpop.f32.mrb[0].mxu0
    %v680 = vadd.f32 %v560, %v679
    %v681 = vpop.f32.mrb[0].mxu0
    %682 = vmatprep.mubr.bf16.mxu0 0
    %683 = vmatmul.mubr.bf16.gmra.mrb[0].mxu0 %v536
    %v684 = vpop.f32.mrb[0].mxu0
    %v685 = vadd.f32 %v560, %v684
    %v686 = vpop.f32.mrb[0].mxu0
    %v687 = vpop.f32.mrb[0].mxu0
    %v688 = vadd.f32 %v560, %v687
    %v689 = vpop.f32.mrb[0].mxu0
    %690 = vmatprep.mubr.bf16.mxu0 0
    %691 = vmatmul.mubr.bf16.gmra.mrb[0].mxu0 %v537
    %v692 = vpop.f32.mrb[0].mxu0
    %v693 = vadd.f32 %v560, %v692
    %v694 = vpop.f32.mrb[0].mxu0
    %v695 = vpop.f32.mrb[0].mxu0
    %v696 = vadd.f32 %v560, %v695
    %v697 = vpop.f32.mrb[0].mxu0
    %698 = vmatprep.mubr.bf16.mxu0 0
    %699 = vmatmul.mubr.bf16.gmra.mrb[0].mxu0 %v538
    %v700 = vpop.f32.mrb[0].mxu0
    %v701 = vadd.f32 %v560, %v700
    %v702 = vpop.f32.mrb[0].mxu0
    %v703 = vpop.f32.mrb[0].mxu0
    %v704 = vadd.f32 %v560, %v703
    %v705 = vpop.f32.mrb[0].mxu0
    %706 = vdwg.mxu0
    %v707 = vmax.f32 %v645, 0.0
    %v708 = vmax.f32 %v648, 0.0
    %v709 = vmax.f32 %v653, 0.0
    %v710 = vmax.f32 %v656, 0.0
    %v711 = vmax.f32 %v661, 0.0
    %v712 = vmax.f32 %v664, 0.0
    %v713 = vmax.f32 %v669, 0.0
    %v714 = vmax.f32 %v672, 0.0
    %v715 = vmax.f32 %v677, 0.0
    %v716 = vmax.f32 %v680, 0.0
    %v717 = vmax.f32 %v685, 0.0
    %v718 = vmax.f32 %v688, 0.0
    %v719 = vmax.f32 %v693, 0.0
    %v720 = vmax.f32 %v696, 0.0
    %v721 = vmax.f32 %v701, 0.0
    %v722 = vmax.f32 %v704, 0.0
    %v723 = vld [vmem:[%s7] sm:$0x1]
    %v724 = vpack.c.bf16 %v708, %v707
    %v725 = vpack.c.bf16 %v710, %v709
    %v726 = vpack.c.bf16 %v712, %v711
    %v727 = vpack.c.bf16 %v714, %v713
    %v728 = vpack.c.bf16 %v716, %v715
    %v729 = vpack.c.bf16 %v718, %v717
    %v730 = vpack.c.bf16 %v720, %v719
    %v731 = vpack.c.bf16 %v722, %v721
    %v732 = vld [vmem:[#allocation2] sm:$0x1]
    %734 = vset.pattern.permute.xlu0 0
    %735 = vperm.xlu0 %734, %v732
    %v736 = vpop.permute.xlu0 %735
    %v738 = vlaneseq
    %v739 = vshrl.u32 %v738, 7
    %v740 = vsub.s32 0, %v739
    %v741 = vrot.slane %v736, %v740
    %742 = vmatprep.subr.bf16.mxu0 0
    %743 = vmatpush1.bf16.xpose.msra.mxu0 %v724
    %744 = vmatprep.subr.bf16.mxu0 0
    %745 = vmatpush1.bf16.xpose.msra.mxu0 %v725
    %746 = vmatprep.subr.bf16.mxu0 0
    %747 = vmatpush1.bf16.xpose.msra.mxu0 %v726
    %748 = vmatprep.subr.bf16.mxu0 0
    %749 = vmatpush1.bf16.xpose.msra.mxu0 %v727
    %750 = vmatprep.subr.bf16.mxu0 0
    %751 = vmatpush1.bf16.xpose.msra.mxu0 %v728
    %752 = vmatprep.subr.bf16.mxu0 0
    %753 = vmatpush1.bf16.xpose.msra.mxu0 %v729
    %754 = vmatprep.subr.bf16.mxu0 0
    %755 = vmatpush1.bf16.xpose.msra.mxu0 %v730
    %756 = vmatprep.subr.bf16.mxu0 0
    %757 = vmatpush1.bf16.xpose.msra.mxu0 %v731
    %758 = vmatprep.subr.bf16.mxu0 0
    %759 = vmatpush1.bf16.xpose.msra.mxu0 0
    %760 = vmatprep.subr.bf16.mxu0 0
    %761 = vmatpush1.bf16.xpose.msra.mxu0 0
    %762 = vmatprep.subr.bf16.mxu0 0
    %763 = vmatpush1.bf16.xpose.msra.mxu0 0
    %764 = vmatprep.subr.bf16.mxu0 0
    %765 = vmatpush1.bf16.xpose.msra.mxu0 0
    %766 = vmatprep.subr.bf16.mxu0 0
    %767 = vmatpush1.bf16.xpose.msra.mxu0 0
    %768 = vmatprep.subr.bf16.mxu0 0
    %769 = vmatpush1.bf16.xpose.msra.mxu0 0
    %770 = vmatprep.subr.bf16.mxu0 0
    %771 = vmatpush1.bf16.xpose.msra.mxu0 0
    %772 = vmatprep.subr.bf16.mxu0 0
    %773 = vmatpush1.bf16.xpose.msra.mxu0 0
    %774 = vmatprep.mubr.bf16.mxu0 0
    %775 = vmatmul.mubr.bf16.gmra.mrb[0].mxu0 %v723
    %v776 = vpop.f32.mrb[0].mxu0
    %v777 = vadd.f32 %v741, %v776
    %v778 = vpop.f32.mrb[0].mxu0
    %v779 = vpop.f32.mrb[0].mxu0
    %v780 = vpop.f32.mrb[0].mxu0
    %781 = vdwg.mxu0
    %v782 = vxor.u32 %v777, 2147483648
    %v783 = vmul.f32 %v782, 1.442695
    %v784 = vpow.pop %v783
    %v785 = vadd.f32 %v784, 1.0
    %v786 = vrcp.pop %v785
    %v787 = vmul.f32 1.0, %v786
    %788 = vst [vmem:[#allocation11] sm:$0x1] %v787
    // Predicated region
    $region54: #{tpu_custom_call.1} parent=1 // pred_check
      _
    $region55: #{tpu_custom_call.1} parent=1 // pred_check_branch
      %790 = sbr.rel (0) target = $region57
    $region56: #{tpu_custom_call.1} parent=1 // pred_region
      %s792 = ssub.s32 16, 16
      %793 = vsyncadd [#allocation5], %s792
      %s795 = sshll.u32 [#allocation11], 4
      %s796 = int_to_ptr.vmem [resolvable:$true] %s795
      %798 = dma.vmem_to_hbm [thread:$0]  %s796, 16, %s9, [#allocation5]
    $region57: #{tpu_custom_call.1} parent=1 // pred_fallthru
      _
    // Predicated region
    $region58: #{tpu_custom_call.1} parent=1 // pred_check
      _
    $region59: #{tpu_custom_call.1} parent=1 // pred_check_branch
      %800 = sbr.rel (0) target = $region61
    $region60: #{tpu_custom_call.1} parent=1 // pred_region
      %801 = dma.done [#allocation5], 16
    $region61: #{tpu_custom_call.1} parent=1 // pred_fallthru
      _
    %802 = vsyncpa [#allocation4], 1
    %803 = vsyncpa [#allocation7], 1
    %804 = vsyncpa [#allocation10], 1
    %805 = vsyncpa [#allocation5], 1

</llo_original>
